<compile_context>
chip_gen: v7x
topology: tpu7x:2x2x1
jax: 0.10.0
libtpu: 0.0.40
codegen_flags: <defaults>
</compile_context>

<pallas_src>
import jax
import jax.numpy as jnp
from jax import lax
from jax.experimental import pallas as pl
from jax.experimental.pallas import tpu as pltpu

_LANE = 128
_MAX_TB = 8192                           # batch-tile cap (lanes)
_X_TILE_VMEM_BUDGET = 8 * 1024 * 1024    # budget for the double-buffered f32 x tile


def _round_up(x, m):
    return ((x + m - 1) // m) * m


def _choose_tb(b_pad, input_dim):
    """Batch tile (multiple of 128): big enough to amortize per-step overhead,
    small enough for VMEM, and yielding >=2 grid steps when the batch allows."""
    in_cols = _round_up(input_dim, _LANE)                       # VMEM lane padding of x's minor dim
    vmem_cap = (_X_TILE_VMEM_BUDGET // (2 * in_cols * 4)) // _LANE * _LANE
    vmem_cap = max(vmem_cap, _LANE)
    two_step = max(_round_up(-(-b_pad // 2), _LANE), _LANE)     # v7x: shard across 2 TCs
    return max(min(_MAX_TB, vmem_cap, two_step, b_pad), _LANE)


def _mlp_kernel(x_ref,
                w1_ref, b1_ref,
                w2_ref, b2_ref,
                w3_ref, b3_ref,
                w4_ref, b4_ref,
                o_ref):
    """Fused 4-layer MLP (BN pre-folded into W/b).

    x_ref : (TB, input_dim) f32   -- natural batch-major layout (no wrapper transpose)
    wN_ref: (out, in)       bf16
    bN_ref: (out, 1)        bf16 (layers 1-3) / f32 (layer 4)
    o_ref : (1, TB)         f32   -- lane-dense output tile
    """
    x = x_ref[...].astype(jnp.bfloat16)

    # Layer 1: contract the shared feature axis of (32, in) and (TB, in) -> (32, TB)
    h = lax.dot_general(w1_ref[...], x, (((1,), (1,)), ((), ())),
                        preferred_element_type=jnp.float32)
    h = jnp.maximum(h.astype(jnp.bfloat16) + b1_ref[...], 0)

    # Layer 2: (128, 32) @ (32, TB) -> (128, TB)
    h = jnp.dot(w2_ref[...], h, preferred_element_type=jnp.float32)
    h = jnp.maximum(h.astype(jnp.bfloat16) + b2_ref[...], 0)

    # Layer 3: (32, 128) @ (128, TB) -> (32, TB)
    h = jnp.dot(w3_ref[...], h, preferred_element_type=jnp.float32)
    h = jnp.maximum(h.astype(jnp.bfloat16) + b3_ref[...], 0)

    # Layer 4: (1, 32) @ (32, TB) -> (1, TB), f32 out
    o_ref[...] = jnp.dot(w4_ref[...], h,
                         preferred_element_type=jnp.float32) + b4_ref[...]


def my_model_forward(x, params):
    """Runs the fused MLP kernel. x: (B, input_dim) f32. Returns (B,) f32."""
    B, input_dim = x.shape

    # Pad batch only to the lane granularity (not to a whole tile).
    B_pad = _round_up(max(B, 1), _LANE)
    if B_pad != B:
        x = jnp.pad(x, ((0, B_pad - B), (0, 0)))

    tb = _choose_tb(B_pad, input_dim)
    grid = (pl.cdiv(B_pad, tb),)

    # x/out tiled over the batch; tiny weights/biases VMEM-resident (constant maps).
    in_specs = [pl.BlockSpec((tb, input_dim), lambda i: (i, 0))]
    for w, b in zip(params[0::2], params[1::2]):
        in_specs.append(pl.BlockSpec(w.shape, lambda i: (0, 0)))
        in_specs.append(pl.BlockSpec(b.shape, lambda i: (0, 0)))
    out_specs = pl.BlockSpec((1, tb), lambda i: (0, i))

    flops = 2 * B_pad * (input_dim * 32 + 32 * 128 + 128 * 32 + 32 * 1)
    bytes_accessed = (B_pad * input_dim * 4 + B_pad * 4
                      + sum(int(p.size) * p.dtype.itemsize for p in params))

    out = pl.pallas_call(
        _mlp_kernel,
        out_shape=jax.ShapeDtypeStruct((1, B_pad), jnp.float32),
        grid=grid,
        in_specs=in_specs,
        out_specs=out_specs,
        compiler_params=pltpu.CompilerParams(
            dimension_semantics=("parallel",),
            vmem_limit_bytes=32 * 1024 * 1024,
        ),
        cost_estimate=pl.CostEstimate(
            flops=flops, transcendentals=0, bytes_accessed=bytes_accessed),
    )(x, *params)

    # squeeze(1) as in the PyTorch forward, then drop batch padding.
    return out[0, :B]


def make_params(input_dim, key):
    """Deterministic synthetic params with eval-mode BatchNorm folded in.

    Returns (w1, b1, w2, b2, w3, b3, w4, b4):
      wN: (out, in) bf16   (BN scale folded into rows)
      bN: (out, 1)  bf16 for layers 1-3 (BN shift folded in), f32 for layer 4
    Feature-major convention: h_out = wN @ h_in + bN.
    """
    dims = [(input_dim, 32), (32, 128), (128, 32), (32, 1)]
    keys = jax.random.split(key, 16)
    params = []
    ki = 0
    eps = 1e-5
    for li, (fan_in, fan_out) in enumerate(dims):
        bound = 1.0 / jnp.sqrt(jnp.float32(fan_in))
        w = jax.random.uniform(keys[ki], (fan_out, fan_in),
                               minval=-bound, maxval=bound,
                               dtype=jnp.float32); ki += 1
        b = jax.random.uniform(keys[ki], (fan_out,),
                               minval=-bound, maxval=bound,
                               dtype=jnp.float32); ki += 1
        if li < 3:  # BatchNorm1d follows the first three Linear layers
            gamma = 1.0 + 0.1 * jax.random.normal(keys[ki], (fan_out,),
                                                  dtype=jnp.float32); ki += 1
            beta = 0.1 * jax.random.normal(keys[ki], (fan_out,),
                                           dtype=jnp.float32); ki += 1
            running_mean = jnp.zeros((fan_out,), jnp.float32)
            running_var = jnp.ones((fan_out,), jnp.float32)
            # Eval-mode BN:  y = gamma*(z - mu)/sqrt(var+eps) + beta = s*z + t
            s = gamma / jnp.sqrt(running_var + eps)
            t = beta - running_mean * s
            # Fold into the Linear:  s*(W x + b) + t = (s[:,None]*W) x + (s*b+t)
            w = w * s[:, None]
            b = b * s + t
            b_dtype = jnp.bfloat16
        else:
            b_dtype = jnp.float32
        params.append(w.astype(jnp.bfloat16))
        params.append(b.reshape(fan_out, 1).astype(b_dtype))
    return tuple(params)


def _reference_forward(x, params):
    """Pure-JAX reference mirroring the kernel's quantization (bf16 inputs/
    weights/epilogues, f32 matmul accumulation)."""
    ws = list(params[0::2])
    bs = list(params[1::2])
    h = x.astype(jnp.bfloat16)
    for i in range(3):
        z = jnp.dot(h.astype(jnp.float32), ws[i].astype(jnp.float32).T)
        h = jnp.maximum(z.astype(jnp.bfloat16) + bs[i].T, 0)
    z = jnp.dot(h.astype(jnp.float32), ws[3].astype(jnp.float32).T) + bs[3].T
    return z[:, 0]


if __name__ == "__main__":
    key = jax.random.PRNGKey(0)
    k_x, k_p = jax.random.split(key)

    B, input_dim = 8, 16
    x = jax.random.normal(k_x, (B, input_dim), dtype=jnp.float32)
    params = make_params(input_dim, k_p)

    y = jax.jit(my_model_forward)(x, params)
    jax.block_until_ready(y)
    assert y.shape == (B,), y.shape

    y_ref = _reference_forward(x, params)
    assert jnp.allclose(y, y_ref, atol=5e-2, rtol=5e-2), (y, y_ref)
    print("KERNEL_OK")
</pallas_src>

<mosaic_0001>
module attributes {stable_mosaic.version = 11 : i64} {
  func.func @_mlp_kernel(%arg0: i32, %arg1: memref<128x16xf32, #tpu.memory_space<vmem>>, %arg2: memref<32x16xbf16, #tpu.memory_space<vmem>>, %arg3: memref<32x1xbf16, #tpu.memory_space<vmem>>, %arg4: memref<128x32xbf16, #tpu.memory_space<vmem>>, %arg5: memref<128x1xbf16, #tpu.memory_space<vmem>>, %arg6: memref<32x128xbf16, #tpu.memory_space<vmem>>, %arg7: memref<32x1xbf16, #tpu.memory_space<vmem>>, %arg8: memref<1x32xbf16, #tpu.memory_space<vmem>>, %arg9: memref<1x1xf32, #tpu.memory_space<vmem>>, %arg10: memref<1x128xf32, #tpu.memory_space<vmem>>) attributes {dimension_semantics = [#tpu.dimension_semantics<parallel>], iteration_bounds = array<i64: 1>, scalar_prefetch = 0 : i64, scratch_operands = 0 : i64, tpu.core_type = #tpu.core_type<tc>, window_params = [{transform_indices = @transform_0, window_bounds = array<i64: 128, 16>}, {pipeline_mode = #tpu.pipeline_mode<synchronous>, transform_indices = @transform_1, window_bounds = array<i64: 32, 16>}, {pipeline_mode = #tpu.pipeline_mode<synchronous>, transform_indices = @transform_2, window_bounds = array<i64: 32, 1>}, {pipeline_mode = #tpu.pipeline_mode<synchronous>, transform_indices = @transform_3, window_bounds = array<i64: 128, 32>}, {pipeline_mode = #tpu.pipeline_mode<synchronous>, transform_indices = @transform_4, window_bounds = array<i64: 128, 1>}, {pipeline_mode = #tpu.pipeline_mode<synchronous>, transform_indices = @transform_5, window_bounds = array<i64: 32, 128>}, {pipeline_mode = #tpu.pipeline_mode<synchronous>, transform_indices = @transform_6, window_bounds = array<i64: 32, 1>}, {pipeline_mode = #tpu.pipeline_mode<synchronous>, transform_indices = @transform_7, window_bounds = array<i64: 1, 32>}, {pipeline_mode = #tpu.pipeline_mode<synchronous>, transform_indices = @transform_8, window_bounds = array<i64: 1, 1>}, {transform_indices = @transform_9, window_bounds = array<i64: 1, 128>}]} {
    %c0 = arith.constant 0 : index
    %c0_0 = arith.constant 0 : index
    %0 = vector.load %arg1[%c0, %c0_0] : memref<128x16xf32, #tpu.memory_space<vmem>>, vector<128x16xf32>
    %1 = arith.truncf %0 : vector<128x16xf32> to vector<128x16xbf16>
    %c0_1 = arith.constant 0 : index
    %c0_2 = arith.constant 0 : index
    %2 = vector.load %arg2[%c0_1, %c0_2] : memref<32x16xbf16, #tpu.memory_space<vmem>>, vector<32x16xbf16>
    %cst = arith.constant dense<0.000000e+00> : vector<32x128xf32>
    %3 = tpu.matmul %2, %1, %cst {dimension_numbers = #tpu.dot_dimension_numbers<[1], [1], [0], [0], [0, 0, 1, 0], [], []>} : vector<32x16xbf16>, vector<128x16xbf16>, vector<32x128xf32> -> vector<32x128xf32>
    %4 = arith.truncf %3 : vector<32x128xf32> to vector<32x128xbf16>
    %c0_3 = arith.constant 0 : index
    %c0_4 = arith.constant 0 : index
    %5 = vector.load %arg3[%c0_3, %c0_4] : memref<32x1xbf16, #tpu.memory_space<vmem>>, vector<32x1xbf16>
    %6 = vector.broadcast %5 : vector<32x1xbf16> to vector<32x128xbf16>
    %7 = arith.addf %4, %6 : vector<32x128xbf16>
    %cst_5 = arith.constant 0.000000e+00 : bf16
    %8 = vector.broadcast %cst_5 : bf16 to vector<32x128xbf16>
    %9 = arith.maximumf %7, %8 : vector<32x128xbf16>
    %c0_6 = arith.constant 0 : index
    %c0_7 = arith.constant 0 : index
    %10 = vector.load %arg4[%c0_6, %c0_7] : memref<128x32xbf16, #tpu.memory_space<vmem>>, vector<128x32xbf16>
    %cst_8 = arith.constant dense<0.000000e+00> : vector<128x128xf32>
    %11 = tpu.matmul %10, %9, %cst_8 {dimension_numbers = #tpu.dot_dimension_numbers<[1], [0], [0], [1], [0, 0, 1, 1], [], []>} : vector<128x32xbf16>, vector<32x128xbf16>, vector<128x128xf32> -> vector<128x128xf32>
    %12 = arith.truncf %11 : vector<128x128xf32> to vector<128x128xbf16>
    %c0_9 = arith.constant 0 : index
    %c0_10 = arith.constant 0 : index
    %13 = vector.load %arg5[%c0_9, %c0_10] : memref<128x1xbf16, #tpu.memory_space<vmem>>, vector<128x1xbf16>
    %14 = vector.broadcast %13 : vector<128x1xbf16> to vector<128x128xbf16>
    %15 = arith.addf %12, %14 : vector<128x128xbf16>
    %cst_11 = arith.constant 0.000000e+00 : bf16
    %16 = vector.broadcast %cst_11 : bf16 to vector<128x128xbf16>
    %17 = arith.maximumf %15, %16 : vector<128x128xbf16>
    %c0_12 = arith.constant 0 : index
    %c0_13 = arith.constant 0 : index
    %18 = vector.load %arg6[%c0_12, %c0_13] : memref<32x128xbf16, #tpu.memory_space<vmem>>, vector<32x128xbf16>
    %cst_14 = arith.constant dense<0.000000e+00> : vector<32x128xf32>
    %19 = tpu.matmul %18, %17, %cst_14 {dimension_numbers = #tpu.dot_dimension_numbers<[1], [0], [0], [1], [0, 0, 1, 1], [], []>} : vector<32x128xbf16>, vector<128x128xbf16>, vector<32x128xf32> -> vector<32x128xf32>
    %20 = arith.truncf %19 : vector<32x128xf32> to vector<32x128xbf16>
    %c0_15 = arith.constant 0 : index
    %c0_16 = arith.constant 0 : index
    %21 = vector.load %arg7[%c0_15, %c0_16] : memref<32x1xbf16, #tpu.memory_space<vmem>>, vector<32x1xbf16>
    %22 = vector.broadcast %21 : vector<32x1xbf16> to vector<32x128xbf16>
    %23 = arith.addf %20, %22 : vector<32x128xbf16>
    %cst_17 = arith.constant 0.000000e+00 : bf16
    %24 = vector.broadcast %cst_17 : bf16 to vector<32x128xbf16>
    %25 = arith.maximumf %23, %24 : vector<32x128xbf16>
    %c0_18 = arith.constant 0 : index
    %c0_19 = arith.constant 0 : index
    %26 = vector.load %arg8[%c0_18, %c0_19] : memref<1x32xbf16, #tpu.memory_space<vmem>>, vector<1x32xbf16>
    %cst_20 = arith.constant dense<0.000000e+00> : vector<1x128xf32>
    %27 = tpu.matmul %26, %25, %cst_20 {dimension_numbers = #tpu.dot_dimension_numbers<[1], [0], [0], [1], [0, 0, 1, 1], [], []>} : vector<1x32xbf16>, vector<32x128xbf16>, vector<1x128xf32> -> vector<1x128xf32>
    %c0_21 = arith.constant 0 : index
    %c0_22 = arith.constant 0 : index
    %28 = vector.load %arg9[%c0_21, %c0_22] : memref<1x1xf32, #tpu.memory_space<vmem>>, vector<1x1xf32>
    %29 = vector.broadcast %28 : vector<1x1xf32> to vector<1x128xf32>
    %30 = arith.addf %27, %29 : vector<1x128xf32>
    %c0_23 = arith.constant 0 : index
    %c0_24 = arith.constant 0 : index
    %31 = vector.load %arg10[%c0_23, %c0_24] : memref<1x128xf32, #tpu.memory_space<vmem>>, vector<1x128xf32>
    tpu.vector_store %arg10[%c0_23, %c0_24], %30 {strides = array<i32>} : memref<1x128xf32, #tpu.memory_space<vmem>>, vector<1x128xf32>,
    return
  }
  func.func @transform_0(%arg0: i32) -> (i32, i32) {
    %c0_i32 = arith.constant 0 : i32
    %c0_i32_0 = arith.constant 0 : i32
    return %arg0, %c0_i32 : i32, i32
  }
  func.func @transform_1(%arg0: i32) -> (i32, i32) {
    %c0_i32 = arith.constant 0 : i32
    %c0_i32_0 = arith.constant 0 : i32
    %c0_i32_1 = arith.constant 0 : i32
    return %c0_i32, %c0_i32_0 : i32, i32
  }
  func.func @transform_2(%arg0: i32) -> (i32, i32) {
    %c0_i32 = arith.constant 0 : i32
    %c0_i32_0 = arith.constant 0 : i32
    %c0_i32_1 = arith.constant 0 : i32
    return %c0_i32, %c0_i32_0 : i32, i32
  }
  func.func @transform_3(%arg0: i32) -> (i32, i32) {
    %c0_i32 = arith.constant 0 : i32
    %c0_i32_0 = arith.constant 0 : i32
    %c0_i32_1 = arith.constant 0 : i32
    return %c0_i32, %c0_i32_0 : i32, i32
  }
  func.func @transform_4(%arg0: i32) -> (i32, i32) {
    %c0_i32 = arith.constant 0 : i32
    %c0_i32_0 = arith.constant 0 : i32
    %c0_i32_1 = arith.constant 0 : i32
    return %c0_i32, %c0_i32_0 : i32, i32
  }
  func.func @transform_5(%arg0: i32) -> (i32, i32) {
    %c0_i32 = arith.constant 0 : i32
    %c0_i32_0 = arith.constant 0 : i32
    %c0_i32_1 = arith.constant 0 : i32
    return %c0_i32, %c0_i32_0 : i32, i32
  }
  func.func @transform_6(%arg0: i32) -> (i32, i32) {
    %c0_i32 = arith.constant 0 : i32
    %c0_i32_0 = arith.constant 0 : i32
    %c0_i32_1 = arith.constant 0 : i32
    return %c0_i32, %c0_i32_0 : i32, i32
  }
  func.func @transform_7(%arg0: i32) -> (i32, i32) {
    %c0_i32 = arith.constant 0 : i32
    %c0_i32_0 = arith.constant 0 : i32
    %c0_i32_1 = arith.constant 0 : i32
    return %c0_i32, %c0_i32_0 : i32, i32
  }
  func.func @transform_8(%arg0: i32) -> (i32, i32) {
    %c0_i32 = arith.constant 0 : i32
    %c0_i32_0 = arith.constant 0 : i32
    %c0_i32_1 = arith.constant 0 : i32
    return %c0_i32, %c0_i32_0 : i32, i32
  }
  func.func @transform_9(%arg0: i32) -> (i32, i32) {
    %c0_i32 = arith.constant 0 : i32
    %c0_i32_0 = arith.constant 0 : i32
    return %c0_i32, %arg0 : i32, i32
  }
}

</mosaic_0001>

<llo_original>
// kernel: my_model_forward.1
$region0: #{my_model_forward.1}
  #allocation0 [shape = 'u32[]', space=smem, size = 0x4, offset = 0x4, fixed_abs, tag = 'smem constant byte address 0x4 - core index']
  #allocation1 [shape = 'u32[144,128]{1,0:T(1,128)}', space=vmem, size = 0x12000, scoped, tag = 'internal scratch']
  #allocation2 [shape = 'f32[1,1]{1,0:T(1,128)S(1)}', space=vmem, size = 0x200, scoped, tag = 'scoped memory for my_model_forward.1']
  %s0 = inlined_call_operand.vmem [shape: f32[128,16], index: 0, kind: input, shape index: {}]
  %s1 = inlined_call_operand.vmem [shape: bf16[32,16], index: 1, kind: input, shape index: {}]
  %s2 = inlined_call_operand.vmem [shape: bf16[32,1], index: 2, kind: input, shape index: {}]
  %s3 = inlined_call_operand.vmem [shape: bf16[128,32], index: 3, kind: input, shape index: {}]
  %s4 = inlined_call_operand.vmem [shape: bf16[128,1], index: 4, kind: input, shape index: {}]
  %s5 = inlined_call_operand.vmem [shape: bf16[32,128], index: 5, kind: input, shape index: {}]
  %s6 = inlined_call_operand.vmem [shape: bf16[32,1], index: 6, kind: input, shape index: {}]
  %s7 = inlined_call_operand.vmem [shape: bf16[1,32], index: 7, kind: input, shape index: {}]
  %s8 = inlined_call_operand.<no memory space> [shape: f32[1,1], index: 8, kind: input, shape index: {}]
  %s9 = inlined_call_operand.vmem [shape: f32[1,128], index: 9, kind: output, shape index: {}]
  %s10 = sld [smem:[#allocation0]]
  $region46: #{my_model_forward.1} parent=0
    _
  %s12 = ssub.s32 1, %s10
  %s13 = scalar_select 0, %s12, %s10
  %v14 = vstv %s8
  %15 = vst [vmem:[#allocation2] sm:$0x1] %v14
  // Predicated region
  $region2: #{my_model_forward.1} parent=0 // pred_check
    _
  $region3: #{my_model_forward.1} parent=0 // pred_check_branch
    %17 = sbr.rel (0) target = $region5
  $region4: #{my_model_forward.1} parent=0 // pred_region
    _
  $region5: #{my_model_forward.1} parent=0 // pred_fallthru
    _
  // Predicated region
  $region6: #{my_model_forward.1} parent=0 // pred_check
    _
  $region7: #{my_model_forward.1} parent=0 // pred_check_branch
    %19 = sbr.rel (0) target = $region9
  $region8: #{my_model_forward.1} parent=0 // pred_region
    _
  $region9: #{my_model_forward.1} parent=0 // pred_fallthru
    _
  // Predicated region
  $region10: #{my_model_forward.1} parent=0 // pred_check
    _
  $region11: #{my_model_forward.1} parent=0 // pred_check_branch
    %21 = sbr.rel (0) target = $region13
  $region12: #{my_model_forward.1} parent=0 // pred_region
    _
  $region13: #{my_model_forward.1} parent=0 // pred_fallthru
    _
  // Predicated region
  $region14: #{my_model_forward.1} parent=0 // pred_check
    _
  $region15: #{my_model_forward.1} parent=0 // pred_check_branch
    %23 = sbr.rel (0) target = $region17
  $region16: #{my_model_forward.1} parent=0 // pred_region
    _
  $region17: #{my_model_forward.1} parent=0 // pred_fallthru
    _
  // Predicated region
  $region18: #{my_model_forward.1} parent=0 // pred_check
    _
  $region19: #{my_model_forward.1} parent=0 // pred_check_branch
    %25 = sbr.rel (0) target = $region21
  $region20: #{my_model_forward.1} parent=0 // pred_region
    _
  $region21: #{my_model_forward.1} parent=0 // pred_fallthru
    _
  // Predicated region
  $region22: #{my_model_forward.1} parent=0 // pred_check
    _
  $region23: #{my_model_forward.1} parent=0 // pred_check_branch
    %27 = sbr.rel (0) target = $region25
  $region24: #{my_model_forward.1} parent=0 // pred_region
    _
  $region25: #{my_model_forward.1} parent=0 // pred_fallthru
    _
  // Predicated region
  $region26: #{my_model_forward.1} parent=0 // pred_check
    _
  $region27: #{my_model_forward.1} parent=0 // pred_check_branch
    %29 = sbr.rel (0) target = $region29
  $region28: #{my_model_forward.1} parent=0 // pred_region
    _
  $region29: #{my_model_forward.1} parent=0 // pred_fallthru
    _
  // Predicated region
  $region30: #{my_model_forward.1} parent=0 // pred_check
    _
  $region31: #{my_model_forward.1} parent=0 // pred_check_branch
    %31 = sbr.rel (0) target = $region33
  $region32: #{my_model_forward.1} parent=0 // pred_region
    _
  $region33: #{my_model_forward.1} parent=0 // pred_fallthru
    _
  // Predicated region
  $region34: #{my_model_forward.1} parent=0 // pred_check
    _
  $region35: #{my_model_forward.1} parent=0 // pred_check_branch
    %33 = sbr.rel (0) target = $region37
  $region36: #{my_model_forward.1} parent=0 // pred_region
    _
  $region37: #{my_model_forward.1} parent=0 // pred_fallthru
    _
  %v35 = vld [vmem:[%s0] sm:$0xff]
  %v36 = vld [vmem:[%s0 + $0x8] sm:$0xff]
  %v37 = vld [vmem:[%s0 + $0x10] sm:$0xff]
  %v38 = vld [vmem:[%s0 + $0x18] sm:$0xff]
  %v39 = vld [vmem:[%s0 + $0x20] sm:$0xff]
  %v40 = vld [vmem:[%s0 + $0x28] sm:$0xff]
  %v41 = vld [vmem:[%s0 + $0x30] sm:$0xff]
  %v42 = vld [vmem:[%s0 + $0x38] sm:$0xff]
  %v43 = vld [vmem:[%s0 + $0x40] sm:$0xff]
  %v44 = vld [vmem:[%s0 + $0x48] sm:$0xff]
  %v45 = vld [vmem:[%s0 + $0x50] sm:$0xff]
  %v46 = vld [vmem:[%s0 + $0x58] sm:$0xff]
  %v47 = vld [vmem:[%s0 + $0x60] sm:$0xff]
  %v48 = vld [vmem:[%s0 + $0x68] sm:$0xff]
  %v49 = vld [vmem:[%s0 + $0x70] sm:$0xff]
  %v50 = vld [vmem:[%s0 + $0x78] sm:$0xff]
  %v51 = vpack.c.bf16 %v36, %v35
  %v52 = vpack.c.bf16 %v38, %v37
  %v53 = vpack.c.bf16 %v40, %v39
  %v54 = vpack.c.bf16 %v42, %v41
  %v55 = vpack.c.bf16 %v44, %v43
  %v56 = vpack.c.bf16 %v46, %v45
  %v57 = vpack.c.bf16 %v48, %v47
  %v58 = vpack.c.bf16 %v50, %v49
  %v59 = vld [vmem:[%s1] sm:$0xf]
  %v60 = vld [vmem:[%s1 + $0x4] sm:$0xf]
  %v61 = vld [vmem:[%s1 + $0x8] sm:$0xf]
  %v62 = vld [vmem:[%s1 + $0xc] sm:$0xf]
  %v67 = vunpack.c.l.b16 %v59
  %v68 = vunpack.c.l.b16 %v60
  %v69 = vunpack.c.l.b16 %v61
  %v70 = vunpack.c.l.b16 %v62
  %v71 = vpack.c.b16 %v68, %v67
  %v72 = vpack.c.b16 %v70, %v69
  %vm73 = vcmask 130048
  %v75 = vsel %vm73, %v71, 0
  %v78 = vsel %vm73, %v72, 0
  %v81 = vsel %vm73, %v51, 0
  %v84 = vsel %vm73, %v52, 0
  %v87 = vsel %vm73, %v53, 0
  %v90 = vsel %vm73, %v54, 0
  %v93 = vsel %vm73, %v55, 0
  %v96 = vsel %vm73, %v56, 0
  %v99 = vsel %vm73, %v57, 0
  %v102 = vsel %vm73, %v58, 0
  %104 = vmatprep.subr.bf16.mxu0 0
  %105 = vmatpush1.bf16.xpose.msra.mxu0 %v81
  %106 = vmatprep.subr.bf16.mxu0 0
  %107 = vmatpush1.bf16.xpose.msra.mxu0 %v84
  %108 = vmatprep.subr.bf16.mxu0 0
  %109 = vmatpush1.bf16.xpose.msra.mxu0 %v87
  %110 = vmatprep.subr.bf16.mxu0 0
  %111 = vmatpush1.bf16.xpose.msra.mxu0 %v90
  %112 = vmatprep.subr.bf16.mxu0 0
  %113 = vmatpush1.bf16.xpose.msra.mxu0 %v93
  %114 = vmatprep.subr.bf16.mxu0 0
  %115 = vmatpush1.bf16.xpose.msra.mxu0 %v96
  %116 = vmatprep.subr.bf16.mxu0 0
  %117 = vmatpush1.bf16.xpose.msra.mxu0 %v99
  %118 = vmatprep.subr.bf16.mxu0 0
  %119 = vmatpush1.bf16.xpose.msra.mxu0 %v102
  %120 = vmatprep.subr.bf16.mxu0 0
  %121 = vmatpush1.bf16.xpose.msra.mxu0 0
  %122 = vmatprep.subr.bf16.mxu0 0
  %123 = vmatpush1.bf16.xpose.msra.mxu0 0
  %124 = vmatprep.subr.bf16.mxu0 0
  %125 = vmatpush1.bf16.xpose.msra.mxu0 0
  %126 = vmatprep.subr.bf16.mxu0 0
  %127 = vmatpush1.bf16.xpose.msra.mxu0 0
  %128 = vmatprep.subr.bf16.mxu0 0
  %129 = vmatpush1.bf16.xpose.msra.mxu0 0
  %130 = vmatprep.subr.bf16.mxu0 0
  %131 = vmatpush1.bf16.xpose.msra.mxu0 0
  %132 = vmatprep.subr.bf16.mxu0 0
  %133 = vmatpush1.bf16.xpose.msra.mxu0 0
  %134 = vmatprep.subr.bf16.mxu0 0
  %135 = vmatpush1.bf16.xpose.msra.mxu0 0
  %136 = vmatprep.mubr.bf16.mxu0 0
  %137 = vmatmul.mubr.bf16.gmra.mrb[0].mxu0 %v75
  %v138 = vpop.f32.mrb[0].mxu0
  %v139 = vadd.f32 0.0, %v138
  %v140 = vpop.f32.mrb[0].mxu0
  %v141 = vpop.f32.mrb[0].mxu0
  %v142 = vadd.f32 0.0, %v141
  %v143 = vpop.f32.mrb[0].mxu0
  %144 = vmatprep.mubr.bf16.mxu0 0
  %145 = vmatmul.mubr.bf16.gmra.mrb[0].mxu0 %v78
  %v146 = vpop.f32.mrb[0].mxu0
  %v147 = vadd.f32 0.0, %v146
  %v148 = vpop.f32.mrb[0].mxu0
  %v149 = vpop.f32.mrb[0].mxu0
  %v150 = vadd.f32 0.0, %v149
  %v151 = vpop.f32.mrb[0].mxu0
  %152 = vdwg.mxu0
  %v153 = vpack.c.bf16 %v142, %v139
  %v154 = vpack.c.bf16 %v150, %v147
  %v155 = vld [vmem:[%s2] sm:$0xf]
  %v156 = vld [vmem:[%s2 + $0x4] sm:$0xf]
  %v157 = vld [vmem:[%s2 + $0x8] sm:$0xf]
  %v158 = vld [vmem:[%s2 + $0xc] sm:$0xf]
  %160 = vset.pattern.permute.xlu0 0
  %161 = vperm.xlu0 %160, %v155
  %v162 = vpop.permute.xlu0 %161
  %v165 = vunpack.c.l.s4 839922192
  %v166 = vunpack.c.0.s8 %v165
  %v167 = vlaneseq
  %v168 = vshrl.u32 %v167, 7
  %v169 = vsub.s32 %v166, %v168
  %v170 = vrot.slane %v162, %v169
  %172 = vset.pattern.permute.xlu0 0
  %173 = vperm.xlu0 %172, %v156
  %v174 = vpop.permute.xlu0 %173
  %v177 = vunpack.c.l.s4 839922192
  %v178 = vunpack.c.0.s8 %v177
  %v179 = vlaneseq
  %v180 = vshrl.u32 %v179, 7
  %v181 = vsub.s32 %v178, %v180
  %v182 = vrot.slane %v174, %v181
  %184 = vset.pattern.permute.xlu0 0
  %185 = vperm.xlu0 %184, %v157
  %v186 = vpop.permute.xlu0 %185
  %v189 = vunpack.c.l.s4 839922192
  %v190 = vunpack.c.0.s8 %v189
  %v191 = vlaneseq
  %v192 = vshrl.u32 %v191, 7
  %v193 = vsub.s32 %v190, %v192
  %v194 = vrot.slane %v186, %v193
  %196 = vset.pattern.permute.xlu0 0
  %197 = vperm.xlu0 %196, %v158
  %v198 = vpop.permute.xlu0 %197
  %v201 = vunpack.c.l.s4 839922192
  %v202 = vunpack.c.0.s8 %v201
  %v203 = vlaneseq
  %v204 = vshrl.u32 %v203, 7
  %v205 = vsub.s32 %v202, %v204
  %v206 = vrot.slane %v198, %v205
  %v211 = vunpack.c.l.b16 %v170
  %v212 = vunpack.c.l.b16 %v182
  %v213 = vunpack.c.l.b16 %v194
  %v214 = vunpack.c.l.b16 %v206
  %v215 = vpack.c.b16 %v212, %v211
  %v216 = vpack.c.b16 %v214, %v213
  %v219 = vadd.bf16 %v153, %v215
  %v220 = vadd.bf16 %v154, %v216
  %v221 = vmax.bf16 %v219, 0
  %v222 = vmax.bf16 %v220, 0
  %v223 = vld [vmem:[%s3] sm:$0xf]
  %v224 = vld [vmem:[%s3 + $0x4] sm:$0xf]
  %v225 = vld [vmem:[%s3 + $0x8] sm:$0xf]
  %v226 = vld [vmem:[%s3 + $0xc] sm:$0xf]
  %v227 = vld [vmem:[%s3 + $0x10] sm:$0xf]
  %v228 = vld [vmem:[%s3 + $0x14] sm:$0xf]
  %v229 = vld [vmem:[%s3 + $0x18] sm:$0xf]
  %v230 = vld [vmem:[%s3 + $0x1c] sm:$0xf]
  %v231 = vld [vmem:[%s3 + $0x20] sm:$0xf]
  %v232 = vld [vmem:[%s3 + $0x24] sm:$0xf]
  %v233 = vld [vmem:[%s3 + $0x28] sm:$0xf]
  %v234 = vld [vmem:[%s3 + $0x2c] sm:$0xf]
  %v235 = vld [vmem:[%s3 + $0x30] sm:$0xf]
  %v236 = vld [vmem:[%s3 + $0x34] sm:$0xf]
  %v237 = vld [vmem:[%s3 + $0x38] sm:$0xf]
  %v238 = vld [vmem:[%s3 + $0x3c] sm:$0xf]
  %v255 = vunpack.c.l.b16 %v223
  %v256 = vunpack.c.l.b16 %v224
  %v257 = vunpack.c.l.b16 %v225
  %v258 = vunpack.c.l.b16 %v226
  %v259 = vunpack.c.l.b16 %v227
  %v260 = vunpack.c.l.b16 %v228
  %v261 = vunpack.c.l.b16 %v229
  %v262 = vunpack.c.l.b16 %v230
  %v263 = vunpack.c.l.b16 %v231
  %v264 = vunpack.c.l.b16 %v232
  %v265 = vunpack.c.l.b16 %v233
  %v266 = vunpack.c.l.b16 %v234
  %v267 = vunpack.c.l.b16 %v235
  %v268 = vunpack.c.l.b16 %v236
  %v269 = vunpack.c.l.b16 %v237
  %v270 = vunpack.c.l.b16 %v238
  %v271 = vpack.c.b16 %v256, %v255
  %v272 = vpack.c.b16 %v258, %v257
  %v273 = vpack.c.b16 %v260, %v259
  %v274 = vpack.c.b16 %v262, %v261
  %v275 = vpack.c.b16 %v264, %v263
  %v276 = vpack.c.b16 %v266, %v265
  %v277 = vpack.c.b16 %v268, %v267
  %v278 = vpack.c.b16 %v270, %v269
  %vm279 = vcmask 261120
  %v281 = vsel %vm279, %v271, 0
  %v284 = vsel %vm279, %v272, 0
  %v287 = vsel %vm279, %v273, 0
  %v290 = vsel %vm279, %v274, 0
  %v293 = vsel %vm279, %v275, 0
  %v296 = vsel %vm279, %v276, 0
  %v299 = vsel %vm279, %v277, 0
  %v302 = vsel %vm279, %v278, 0
  %304 = vmatprep.subr.bf16.mxu0 0
  %305 = vmatpush1.bf16.msra.mxu0 %v221
  %306 = vmatprep.subr.bf16.mxu0 0
  %307 = vmatpush1.bf16.msra.mxu0 %v222
  %308 = vmatprep.subr.bf16.mxu0 0
  %309 = vmatpush1.bf16.msra.mxu0 0
  %310 = vmatprep.subr.bf16.mxu0 0
  %311 = vmatpush1.bf16.msra.mxu0 0
  %312 = vmatprep.subr.bf16.mxu0 0
  %313 = vmatpush1.bf16.msra.mxu0 0
  %314 = vmatprep.subr.bf16.mxu0 0
  %315 = vmatpush1.bf16.msra.mxu0 0
  %316 = vmatprep.subr.bf16.mxu0 0
  %317 = vmatpush1.bf16.msra.mxu0 0
  %318 = vmatprep.subr.bf16.mxu0 0
  %319 = vmatpush1.bf16.msra.mxu0 0
  %320 = vmatprep.subr.bf16.mxu0 0
  %321 = vmatpush1.bf16.msra.mxu0 0
  %322 = vmatprep.subr.bf16.mxu0 0
  %323 = vmatpush1.bf16.msra.mxu0 0
  %324 = vmatprep.subr.bf16.mxu0 0
  %325 = vmatpush1.bf16.msra.mxu0 0
  %326 = vmatprep.subr.bf16.mxu0 0
  %327 = vmatpush1.bf16.msra.mxu0 0
  %328 = vmatprep.subr.bf16.mxu0 0
  %329 = vmatpush1.bf16.msra.mxu0 0
  %330 = vmatprep.subr.bf16.mxu0 0
  %331 = vmatpush1.bf16.msra.mxu0 0
  %332 = vmatprep.subr.bf16.mxu0 0
  %333 = vmatpush1.bf16.msra.mxu0 0
  %334 = vmatprep.subr.bf16.mxu0 0
  %335 = vmatpush1.bf16.msra.mxu0 0
  %336 = vmatprep.mubr.bf16.mxu0 0
  %337 = vmatmul.mubr.bf16.gmra.mrb[0].mxu0 %v281
  %v338 = vpop.f32.mrb[0].mxu0
  %v339 = vadd.f32 0.0, %v338
  %v340 = vpop.f32.mrb[0].mxu0
  %v341 = vpop.f32.mrb[0].mxu0
  %v342 = vadd.f32 0.0, %v341
  %v343 = vpop.f32.mrb[0].mxu0
  %344 = vmatprep.mubr.bf16.mxu0 0
  %345 = vmatmul.mubr.bf16.gmra.mrb[0].mxu0 %v284
  %v346 = vpop.f32.mrb[0].mxu0
  %v347 = vadd.f32 0.0, %v346
  %v348 = vpop.f32.mrb[0].mxu0
  %v349 = vpop.f32.mrb[0].mxu0
  %v350 = vadd.f32 0.0, %v349
  %v351 = vpop.f32.mrb[0].mxu0
  %352 = vmatprep.mubr.bf16.mxu0 0
  %353 = vmatmul.mubr.bf16.gmra.mrb[0].mxu0 %v287
  %v354 = vpop.f32.mrb[0].mxu0
  %v355 = vadd.f32 0.0, %v354
  %v356 = vpop.f32.mrb[0].mxu0
  %v357 = vpop.f32.mrb[0].mxu0
  %v358 = vadd.f32 0.0, %v357
  %v359 = vpop.f32.mrb[0].mxu0
  %360 = vmatprep.mubr.bf16.mxu0 0
  %361 = vmatmul.mubr.bf16.gmra.mrb[0].mxu0 %v290
  %v362 = vpop.f32.mrb[0].mxu0
  %v363 = vadd.f32 0.0, %v362
  %v364 = vpop.f32.mrb[0].mxu0
  %v365 = vpop.f32.mrb[0].mxu0
  %v366 = vadd.f32 0.0, %v365
  %v367 = vpop.f32.mrb[0].mxu0
  %368 = vmatprep.mubr.bf16.mxu0 0
  %369 = vmatmul.mubr.bf16.gmra.mrb[0].mxu0 %v293
  %v370 = vpop.f32.mrb[0].mxu0
  %v371 = vadd.f32 0.0, %v370
  %v372 = vpop.f32.mrb[0].mxu0
  %v373 = vpop.f32.mrb[0].mxu0
  %v374 = vadd.f32 0.0, %v373
  %v375 = vpop.f32.mrb[0].mxu0
  %376 = vmatprep.mubr.bf16.mxu0 0
  %377 = vmatmul.mubr.bf16.gmra.mrb[0].mxu0 %v296
  %v378 = vpop.f32.mrb[0].mxu0
  %v379 = vadd.f32 0.0, %v378
  %v380 = vpop.f32.mrb[0].mxu0
  %v381 = vpop.f32.mrb[0].mxu0
  %v382 = vadd.f32 0.0, %v381
  %v383 = vpop.f32.mrb[0].mxu0
  %384 = vmatprep.mubr.bf16.mxu0 0
  %385 = vmatmul.mubr.bf16.gmra.mrb[0].mxu0 %v299
  %v386 = vpop.f32.mrb[0].mxu0
  %v387 = vadd.f32 0.0, %v386
  %v388 = vpop.f32.mrb[0].mxu0
  %v389 = vpop.f32.mrb[0].mxu0
  %v390 = vadd.f32 0.0, %v389
  %v391 = vpop.f32.mrb[0].mxu0
  %392 = vmatprep.mubr.bf16.mxu0 0
  %393 = vmatmul.mubr.bf16.gmra.mrb[0].mxu0 %v302
  %v394 = vpop.f32.mrb[0].mxu0
  %v395 = vadd.f32 0.0, %v394
  %v396 = vpop.f32.mrb[0].mxu0
  %v397 = vpop.f32.mrb[0].mxu0
  %v398 = vadd.f32 0.0, %v397
  %v399 = vpop.f32.mrb[0].mxu0
  %400 = vdwg.mxu0
  %v401 = vpack.c.bf16 %v342, %v339
  %v402 = vpack.c.bf16 %v350, %v347
  %v403 = vpack.c.bf16 %v358, %v355
  %v404 = vpack.c.bf16 %v366, %v363
  %v405 = vpack.c.bf16 %v374, %v371
  %v406 = vpack.c.bf16 %v382, %v379
  %v407 = vpack.c.bf16 %v390, %v387
  %v408 = vpack.c.bf16 %v398, %v395
  %v409 = vld [vmem:[%s4] sm:$0xf]
  %v410 = vld [vmem:[%s4 + $0x4] sm:$0xf]
  %v411 = vld [vmem:[%s4 + $0x8] sm:$0xf]
  %v412 = vld [vmem:[%s4 + $0xc] sm:$0xf]
  %v413 = vld [vmem:[%s4 + $0x10] sm:$0xf]
  %v414 = vld [vmem:[%s4 + $0x14] sm:$0xf]
  %v415 = vld [vmem:[%s4 + $0x18] sm:$0xf]
  %v416 = vld [vmem:[%s4 + $0x1c] sm:$0xf]
  %v417 = vld [vmem:[%s4 + $0x20] sm:$0xf]
  %v418 = vld [vmem:[%s4 + $0x24] sm:$0xf]
  %v419 = vld [vmem:[%s4 + $0x28] sm:$0xf]
  %v420 = vld [vmem:[%s4 + $0x2c] sm:$0xf]
  %v421 = vld [vmem:[%s4 + $0x30] sm:$0xf]
  %v422 = vld [vmem:[%s4 + $0x34] sm:$0xf]
  %v423 = vld [vmem:[%s4 + $0x38] sm:$0xf]
  %v424 = vld [vmem:[%s4 + $0x3c] sm:$0xf]
  %426 = vset.pattern.permute.xlu0 0
  %427 = vperm.xlu0 %426, %v409
  %v428 = vpop.permute.xlu0 %427
  %v431 = vunpack.c.l.s4 839922192
  %v432 = vunpack.c.0.s8 %v431
  %v433 = vlaneseq
  %v434 = vshrl.u32 %v433, 7
  %v435 = vsub.s32 %v432, %v434
  %v436 = vrot.slane %v428, %v435
  %438 = vset.pattern.permute.xlu0 0
  %439 = vperm.xlu0 %438, %v410
  %v440 = vpop.permute.xlu0 %439
  %v443 = vunpack.c.l.s4 839922192
  %v444 = vunpack.c.0.s8 %v443
  %v445 = vlaneseq
  %v446 = vshrl.u32 %v445, 7
  %v447 = vsub.s32 %v444, %v446
  %v448 = vrot.slane %v440, %v447
  %450 = vset.pattern.permute.xlu0 0
  %451 = vperm.xlu0 %450, %v411
  %v452 = vpop.permute.xlu0 %451
  %v455 = vunpack.c.l.s4 839922192
  %v456 = vunpack.c.0.s8 %v455
  %v457 = vlaneseq
  %v458 = vshrl.u32 %v457, 7
  %v459 = vsub.s32 %v456, %v458
  %v460 = vrot.slane %v452, %v459
  %462 = vset.pattern.permute.xlu0 0
  %463 = vperm.xlu0 %462, %v412
  %v464 = vpop.permute.xlu0 %463
  %v467 = vunpack.c.l.s4 839922192
  %v468 = vunpack.c.0.s8 %v467
  %v469 = vlaneseq
  %v470 = vshrl.u32 %v469, 7
  %v471 = vsub.s32 %v468, %v470
  %v472 = vrot.slane %v464, %v471
  %474 = vset.pattern.permute.xlu0 0
  %475 = vperm.xlu0 %474, %v413
  %v476 = vpop.permute.xlu0 %475
  %v479 = vunpack.c.l.s4 839922192
  %v480 = vunpack.c.0.s8 %v479
  %v481 = vlaneseq
  %v482 = vshrl.u32 %v481, 7
  %v483 = vsub.s32 %v480, %v482
  %v484 = vrot.slane %v476, %v483
  %486 = vset.pattern.permute.xlu0 0
  %487 = vperm.xlu0 %486, %v414
  %v488 = vpop.permute.xlu0 %487
  %v491 = vunpack.c.l.s4 839922192
  %v492 = vunpack.c.0.s8 %v491
  %v493 = vlaneseq
  %v494 = vshrl.u32 %v493, 7
  %v495 = vsub.s32 %v492, %v494
  %v496 = vrot.slane %v488, %v495
  %498 = vset.pattern.permute.xlu0 0
  %499 = vperm.xlu0 %498, %v415
  %v500 = vpop.permute.xlu0 %499
  %v503 = vunpack.c.l.s4 839922192
  %v504 = vunpack.c.0.s8 %v503
  %v505 = vlaneseq
  %v506 = vshrl.u32 %v505, 7
  %v507 = vsub.s32 %v504, %v506
  %v508 = vrot.slane %v500, %v507
  %510 = vset.pattern.permute.xlu0 0
  %511 = vperm.xlu0 %510, %v416
  %v512 = vpop.permute.xlu0 %511
  %v515 = vunpack.c.l.s4 839922192
  %v516 = vunpack.c.0.s8 %v515
  %v517 = vlaneseq
  %v518 = vshrl.u32 %v517, 7
  %v519 = vsub.s32 %v516, %v518
  %v520 = vrot.slane %v512, %v519
  %522 = vset.pattern.permute.xlu0 0
  %523 = vperm.xlu0 %522, %v417
  %v524 = vpop.permute.xlu0 %523
  %v527 = vunpack.c.l.s4 839922192
  %v528 = vunpack.c.0.s8 %v527
  %v529 = vlaneseq
  %v530 = vshrl.u32 %v529, 7
  %v531 = vsub.s32 %v528, %v530
  %v532 = vrot.slane %v524, %v531
  %534 = vset.pattern.permute.xlu0 0
  %535 = vperm.xlu0 %534, %v418
  %v536 = vpop.permute.xlu0 %535
  %v539 = vunpack.c.l.s4 839922192
  %v540 = vunpack.c.0.s8 %v539
  %v541 = vlaneseq
  %v542 = vshrl.u32 %v541, 7
  %v543 = vsub.s32 %v540, %v542
  %v544 = vrot.slane %v536, %v543
  %546 = vset.pattern.permute.xlu0 0
  %547 = vperm.xlu0 %546, %v419
  %v548 = vpop.permute.xlu0 %547
  %v551 = vunpack.c.l.s4 839922192
  %v552 = vunpack.c.0.s8 %v551
  %v553 = vlaneseq
  %v554 = vshrl.u32 %v553, 7
  %v555 = vsub.s32 %v552, %v554
  %v556 = vrot.slane %v548, %v555
  %558 = vset.pattern.permute.xlu0 0
  %559 = vperm.xlu0 %558, %v420
  %v560 = vpop.permute.xlu0 %559
  %v563 = vunpack.c.l.s4 839922192
  %v564 = vunpack.c.0.s8 %v563
  %v565 = vlaneseq
  %v566 = vshrl.u32 %v565, 7
  %v567 = vsub.s32 %v564, %v566
  %v568 = vrot.slane %v560, %v567
  %570 = vset.pattern.permute.xlu0 0
  %571 = vperm.xlu0 %570, %v421
  %v572 = vpop.permute.xlu0 %571
  %v575 = vunpack.c.l.s4 839922192
  %v576 = vunpack.c.0.s8 %v575
  %v577 = vlaneseq
  %v578 = vshrl.u32 %v577, 7
  %v579 = vsub.s32 %v576, %v578
  %v580 = vrot.slane %v572, %v579
  %582 = vset.pattern.permute.xlu0 0
  %583 = vperm.xlu0 %582, %v422
  %v584 = vpop.permute.xlu0 %583
  %v587 = vunpack.c.l.s4 839922192
  %v588 = vunpack.c.0.s8 %v587
  %v589 = vlaneseq
  %v590 = vshrl.u32 %v589, 7
  %v591 = vsub.s32 %v588, %v590
  %v592 = vrot.slane %v584, %v591
  %594 = vset.pattern.permute.xlu0 0
  %595 = vperm.xlu0 %594, %v423
  %v596 = vpop.permute.xlu0 %595
  %v599 = vunpack.c.l.s4 839922192
  %v600 = vunpack.c.0.s8 %v599
  %v601 = vlaneseq
  %v602 = vshrl.u32 %v601, 7
  %v603 = vsub.s32 %v600, %v602
  %v604 = vrot.slane %v596, %v603
  %606 = vset.pattern.permute.xlu0 0
  %607 = vperm.xlu0 %606, %v424
  %v608 = vpop.permute.xlu0 %607
  %v611 = vunpack.c.l.s4 839922192
  %v612 = vunpack.c.0.s8 %v611
  %v613 = vlaneseq
  %v614 = vshrl.u32 %v613, 7
  %v615 = vsub.s32 %v612, %v614
  %v616 = vrot.slane %v608, %v615
  %v633 = vunpack.c.l.b16 %v436
  %v634 = vunpack.c.l.b16 %v448
  %v635 = vunpack.c.l.b16 %v460
  %v636 = vunpack.c.l.b16 %v472
  %v637 = vunpack.c.l.b16 %v484
  %v638 = vunpack.c.l.b16 %v496
  %v639 = vunpack.c.l.b16 %v508
  %v640 = vunpack.c.l.b16 %v520
  %v641 = vunpack.c.l.b16 %v532
  %v642 = vunpack.c.l.b16 %v544
  %v643 = vunpack.c.l.b16 %v556
  %v644 = vunpack.c.l.b16 %v568
  %v645 = vunpack.c.l.b16 %v580
  %v646 = vunpack.c.l.b16 %v592
  %v647 = vunpack.c.l.b16 %v604
  %v648 = vunpack.c.l.b16 %v616
  %v649 = vpack.c.b16 %v634, %v633
  %v650 = vpack.c.b16 %v636, %v635
  %v651 = vpack.c.b16 %v638, %v637
  %v652 = vpack.c.b16 %v640, %v639
  %v653 = vpack.c.b16 %v642, %v641
  %v654 = vpack.c.b16 %v644, %v643
  %v655 = vpack.c.b16 %v646, %v645
  %v656 = vpack.c.b16 %v648, %v647
  %v665 = vadd.bf16 %v401, %v649
  %v666 = vadd.bf16 %v402, %v650
  %v667 = vadd.bf16 %v403, %v651
  %v668 = vadd.bf16 %v404, %v652
  %v669 = vadd.bf16 %v405, %v653
  %v670 = vadd.bf16 %v406, %v654
  %v671 = vadd.bf16 %v407, %v655
  %v672 = vadd.bf16 %v408, %v656
  %v673 = vmax.bf16 %v665, 0
  %v674 = vmax.bf16 %v666, 0
  %v675 = vmax.bf16 %v667, 0
  %v676 = vmax.bf16 %v668, 0
  %v677 = vmax.bf16 %v669, 0
  %v678 = vmax.bf16 %v670, 0
  %v679 = vmax.bf16 %v671, 0
  %v680 = vmax.bf16 %v672, 0
  %v681 = vld [vmem:[%s5] sm:$0xf]
  %v682 = vld [vmem:[%s5 + $0x4] sm:$0xf]
  %v683 = vld [vmem:[%s5 + $0x8] sm:$0xf]
  %v684 = vld [vmem:[%s5 + $0xc] sm:$0xf]
  %v689 = vunpack.c.l.b16 %v681
  %v690 = vunpack.c.l.b16 %v682
  %v691 = vunpack.c.l.b16 %v683
  %v692 = vunpack.c.l.b16 %v684
  %v693 = vpack.c.b16 %v690, %v689
  %v694 = vpack.c.b16 %v692, %v691
  %697 = vmatprep.subr.bf16.mxu0 0
  %698 = vmatpush1.bf16.msra.mxu0 %v673
  %699 = vmatprep.subr.bf16.mxu0 0
  %700 = vmatpush1.bf16.msra.mxu0 %v674
  %701 = vmatprep.subr.bf16.mxu0 0
  %702 = vmatpush1.bf16.msra.mxu0 %v675
  %703 = vmatprep.subr.bf16.mxu0 0
  %704 = vmatpush1.bf16.msra.mxu0 %v676
  %705 = vmatprep.subr.bf16.mxu0 0
  %706 = vmatpush1.bf16.msra.mxu0 %v677
  %707 = vmatprep.subr.bf16.mxu0 0
  %708 = vmatpush1.bf16.msra.mxu0 %v678
  %709 = vmatprep.subr.bf16.mxu0 0
  %710 = vmatpush1.bf16.msra.mxu0 %v679
  %711 = vmatprep.subr.bf16.mxu0 0
  %712 = vmatpush1.bf16.msra.mxu0 %v680
  %713 = vmatprep.subr.bf16.mxu0 0
  %714 = vmatpush1.bf16.msra.mxu0 0
  %715 = vmatprep.subr.bf16.mxu0 0
  %716 = vmatpush1.bf16.msra.mxu0 0
  %717 = vmatprep.subr.bf16.mxu0 0
  %718 = vmatpush1.bf16.msra.mxu0 0
  %719 = vmatprep.subr.bf16.mxu0 0
  %720 = vmatpush1.bf16.msra.mxu0 0
  %721 = vmatprep.subr.bf16.mxu0 0
  %722 = vmatpush1.bf16.msra.mxu0 0
  %723 = vmatprep.subr.bf16.mxu0 0
  %724 = vmatpush1.bf16.msra.mxu0 0
  %725 = vmatprep.subr.bf16.mxu0 0
  %726 = vmatpush1.bf16.msra.mxu0 0
  %727 = vmatprep.subr.bf16.mxu0 0
  %728 = vmatpush1.bf16.msra.mxu0 0
  %729 = vmatprep.mubr.bf16.mxu0 0
  %730 = vmatmul.mubr.bf16.gmra.mrb[0].mxu0 %v693
  %v731 = vpop.f32.mrb[0].mxu0
  %v732 = vadd.f32 0.0, %v731
  %v733 = vpop.f32.mrb[0].mxu0
  %v734 = vpop.f32.mrb[0].mxu0
  %v735 = vadd.f32 0.0, %v734
  %v736 = vpop.f32.mrb[0].mxu0
  %737 = vmatprep.mubr.bf16.mxu0 0
  %738 = vmatmul.mubr.bf16.gmra.mrb[0].mxu0 %v694
  %v739 = vpop.f32.mrb[0].mxu0
  %v740 = vadd.f32 0.0, %v739
  %v741 = vpop.f32.mrb[0].mxu0
  %v742 = vpop.f32.mrb[0].mxu0
  %v743 = vadd.f32 0.0, %v742
  %v744 = vpop.f32.mrb[0].mxu0
  %745 = vdwg.mxu0
  %v746 = vpack.c.bf16 %v735, %v732
  %v747 = vpack.c.bf16 %v743, %v740
  %v748 = vld [vmem:[%s6] sm:$0xf]
  %v749 = vld [vmem:[%s6 + $0x4] sm:$0xf]
  %v750 = vld [vmem:[%s6 + $0x8] sm:$0xf]
  %v751 = vld [vmem:[%s6 + $0xc] sm:$0xf]
  %753 = vset.pattern.permute.xlu0 0
  %754 = vperm.xlu0 %753, %v748
  %v755 = vpop.permute.xlu0 %754
  %v758 = vunpack.c.l.s4 839922192
  %v759 = vunpack.c.0.s8 %v758
  %v760 = vlaneseq
  %v761 = vshrl.u32 %v760, 7
  %v762 = vsub.s32 %v759, %v761
  %v763 = vrot.slane %v755, %v762
  %765 = vset.pattern.permute.xlu0 0
  %766 = vperm.xlu0 %765, %v749
  %v767 = vpop.permute.xlu0 %766
  %v770 = vunpack.c.l.s4 839922192
  %v771 = vunpack.c.0.s8 %v770
  %v772 = vlaneseq
  %v773 = vshrl.u32 %v772, 7
  %v774 = vsub.s32 %v771, %v773
  %v775 = vrot.slane %v767, %v774
  %777 = vset.pattern.permute.xlu0 0
  %778 = vperm.xlu0 %777, %v750
  %v779 = vpop.permute.xlu0 %778
  %v782 = vunpack.c.l.s4 839922192
  %v783 = vunpack.c.0.s8 %v782
  %v784 = vlaneseq
  %v785 = vshrl.u32 %v784, 7
  %v786 = vsub.s32 %v783, %v785
  %v787 = vrot.slane %v779, %v786
  %789 = vset.pattern.permute.xlu0 0
  %790 = vperm.xlu0 %789, %v751
  %v791 = vpop.permute.xlu0 %790
  %v794 = vunpack.c.l.s4 839922192
  %v795 = vunpack.c.0.s8 %v794
  %v796 = vlaneseq
  %v797 = vshrl.u32 %v796, 7
  %v798 = vsub.s32 %v795, %v797
  %v799 = vrot.slane %v791, %v798
  %v804 = vunpack.c.l.b16 %v763
  %v805 = vunpack.c.l.b16 %v775
  %v806 = vunpack.c.l.b16 %v787
  %v807 = vunpack.c.l.b16 %v799
  %v808 = vpack.c.b16 %v805, %v804
  %v809 = vpack.c.b16 %v807, %v806
  %v812 = vadd.bf16 %v746, %v808
  %v813 = vadd.bf16 %v747, %v809
  %v814 = vmax.bf16 %v812, 0
  %v815 = vmax.bf16 %v813, 0
  %v816 = vld [vmem:[%s7] sm:$0x1]
  %v817 = vld [vmem:[#allocation2] sm:$0x1]
  %819 = vset.pattern.permute.xlu0 0
  %820 = vperm.xlu0 %819, %v817
  %v821 = vpop.permute.xlu0 %820
  %v823 = vlaneseq
  %v824 = vshrl.u32 %v823, 7
  %v825 = vsub.s32 0, %v824
  %v826 = vrot.slane %v821, %v825
  %v828 = vsel %vm279, %v816, 0
  %830 = vmatprep.subr.bf16.mxu0 0
  %831 = vmatpush1.bf16.msra.mxu0 %v814
  %832 = vmatprep.subr.bf16.mxu0 0
  %833 = vmatpush1.bf16.msra.mxu0 %v815
  %834 = vmatprep.subr.bf16.mxu0 0
  %835 = vmatpush1.bf16.msra.mxu0 0
  %836 = vmatprep.subr.bf16.mxu0 0
  %837 = vmatpush1.bf16.msra.mxu0 0
  %838 = vmatprep.subr.bf16.mxu0 0
  %839 = vmatpush1.bf16.msra.mxu0 0
  %840 = vmatprep.subr.bf16.mxu0 0
  %841 = vmatpush1.bf16.msra.mxu0 0
  %842 = vmatprep.subr.bf16.mxu0 0
  %843 = vmatpush1.bf16.msra.mxu0 0
  %844 = vmatprep.subr.bf16.mxu0 0
  %845 = vmatpush1.bf16.msra.mxu0 0
  %846 = vmatprep.subr.bf16.mxu0 0
  %847 = vmatpush1.bf16.msra.mxu0 0
  %848 = vmatprep.subr.bf16.mxu0 0
  %849 = vmatpush1.bf16.msra.mxu0 0
  %850 = vmatprep.subr.bf16.mxu0 0
  %851 = vmatpush1.bf16.msra.mxu0 0
  %852 = vmatprep.subr.bf16.mxu0 0
  %853 = vmatpush1.bf16.msra.mxu0 0
  %854 = vmatprep.subr.bf16.mxu0 0
  %855 = vmatpush1.bf16.msra.mxu0 0
  %856 = vmatprep.subr.bf16.mxu0 0
  %857 = vmatpush1.bf16.msra.mxu0 0
  %858 = vmatprep.subr.bf16.mxu0 0
  %859 = vmatpush1.bf16.msra.mxu0 0
  %860 = vmatprep.subr.bf16.mxu0 0
  %861 = vmatpush1.bf16.msra.mxu0 0
  %862 = vmatprep.mubr.bf16.mxu0 0
  %863 = vmatmul.mubr.bf16.gmra.mrb[0].mxu0 %v828
  %v864 = vpop.f32.mrb[0].mxu0
  %v865 = vadd.f32 %v826, %v864
  %v866 = vpop.f32.mrb[0].mxu0
  %v867 = vpop.f32.mrb[0].mxu0
  %v868 = vpop.f32.mrb[0].mxu0
  %869 = vdwg.mxu0
  %870 = vst [vmem:[%s9] sm:$0x1] %v865
  // Predicated region
  $region38: #{my_model_forward.1} parent=0 // pred_check
    _
  $region39: #{my_model_forward.1} parent=0 // pred_check_branch
    %872 = sbr.rel (0) target = $region41
  $region40: #{my_model_forward.1} parent=0 // pred_region
    _
  $region41: #{my_model_forward.1} parent=0 // pred_fallthru
    _
  // Predicated region
  $region42: #{my_model_forward.1} parent=0 // pred_check
    _
  $region43: #{my_model_forward.1} parent=0 // pred_check_branch
    %874 = sbr.rel (0) target = $region45
  $region44: #{my_model_forward.1} parent=0 // pred_region
    _
  $region45: #{my_model_forward.1} parent=0 // pred_fallthru
    _

</llo_original>
